<compile_context>
chip_gen: v7x
topology: tpu7x:2x2x1
jax: 0.10.0
libtpu: 0.0.40
codegen_flags: <defaults>
</compile_context>

<pallas_src>
import functools

import jax
import jax.numpy as jnp
import numpy as np
from jax.experimental import pallas as pl
from jax.experimental.pallas import tpu as pltpu


def _round_up(x, m):
    return ((x + m - 1) // m) * m


def _pick_t_blk(T, B_blk, Hp, I, bytes_per=4, budget=40 * 1024 * 1024):
    """Largest divisor of T whose chunk footprint fits the VMEM budget."""
    # Grid-invariant blocks (double-buffered by the pipeline): W_ih^T, W_hh^T, bias, W_lin.
    fixed = 2 * bytes_per * (I * Hp + Hp * Hp + 2 * Hp)
    # h0 input block + hn output block (double-buffered) + persistent h scratch.
    fixed += bytes_per * (5 * B_blk * Hp)
    avail = max(budget - fixed, budget // 8)
    # Per unit of T_blk: x block (2x buffered) + out block (2x buffered) + xp scratch (1x).
    per_t = bytes_per * B_blk * (2 * I + 2 + Hp)
    cap = max(1, min(avail // per_t, 512, T))
    for c in range(int(cap), 0, -1):
        if T % c == 0:
            return c
    return 1


def rnn_kernel(x_ref, h0_ref, wih_ref, whh_ref, b_ref, wlin_ref, blin_ref,
               out_ref, hn_ref, h_scratch, xp_scratch):
    """One (batch_block, time_chunk) grid step.

    x_ref    : (T_blk*B_blk, I)  input chunk, rows ordered t-major, b-minor
    h0_ref   : (B_blk, Hp)       initial hidden state (padded)
    wih_ref  : (I, Hp)           W_ih^T (padded)
    whh_ref  : (Hp, Hp)          W_hh^T (padded)
    b_ref    : (1, Hp)           b_ih + b_hh (padded)
    wlin_ref : (1, Hp)           W_lin row (padded)
    blin_ref : (1, 1) SMEM       b_lin scalar
    out_ref  : (B_blk, T_blk)    linear(Y) chunk, lane-dense (T on lanes)
    hn_ref   : (B_blk, Hp)       final hidden state (written on last chunk)
    h_scratch: (B_blk, Hp)  f32  recurrent state carried across time chunks
    xp_scratch:(T_blk*B_blk, Hp) f32  hoisted input projection for this chunk
    """
    t_chunk = pl.program_id(1)
    n_chunks = pl.num_programs(1)
    TB, _ = x_ref.shape
    B_blk, Hp = h_scratch.shape
    T_blk = TB // B_blk

    # (Re)load the initial hidden state at the start of every batch block.
    @pl.when(t_chunk == 0)
    def _():
        h_scratch[...] = h0_ref[...].astype(jnp.float32)

    # ---- phase 1: hoisted input projection — one large MXU matmul per chunk.
    xp_scratch[...] = (
        jnp.dot(x_ref[...], wih_ref[...], preferred_element_type=jnp.float32)
        + b_ref[...]                      # (1, Hp) broadcast over rows
    )

    wlin_row = wlin_ref[...]              # (1, Hp), stays in vregs
    blin = blin_ref[0, 0]
    lane_t = jax.lax.broadcasted_iota(jnp.int32, (B_blk, T_blk), 1)

    # ---- phase 2: inherently sequential recurrence. h and the per-step linear
    # output live in the fori_loop carry (vregs); no VMEM round-trip per step.
    def step(t, carry):
        h_prev, out_acc = carry
        r = pl.multiple_of(t * B_blk, B_blk)        # sublane-aligned row offset
        h_new = jnp.tanh(
            xp_scratch[pl.ds(r, B_blk), :]
            + jnp.dot(h_prev, whh_ref[...], preferred_element_type=jnp.float32))
        # Output projection: VPU multiply + lane reduce (MXU stays free).
        o_t = jnp.sum(h_new * wlin_row, axis=-1, keepdims=True)   # (B_blk, 1)
        out_acc = jnp.where(lane_t == t, o_t, out_acc)             # place in column t
        return h_new, out_acc

    h_init = h_scratch[...]
    out_init = jnp.zeros((B_blk, T_blk), jnp.float32)
    h_last, out_acc = jax.lax.fori_loop(0, T_blk, step, (h_init, out_init),
                                        unroll=8)

    # ---- phase 3: one dense, lane-wide store per chunk; persist h for next chunk.
    h_scratch[...] = h_last
    out_ref[...] = (out_acc + blin).astype(out_ref.dtype)

    @pl.when(t_chunk == n_chunks - 1)
    def _():
        hn_ref[...] = h_last.astype(hn_ref.dtype)


@jax.jit
def rnn_forward(x, h0, w_ih, w_hh, b_ih, b_hh, w_lin, b_lin):
    """x: (T, B, I), h0: (1, B, H). Returns (output (T, B, 1), state (1, B, H))."""
    T, B, I = x.shape
    H = w_ih.shape[0]
    f32 = jnp.float32

    # Pad to TPU-friendly shapes: H -> multiple of 128 lanes, B -> multiple of 8 sublanes.
    Hp = _round_up(H, 128)
    Bp = _round_up(B, 8)
    # Split the independent batch dim across 2 blocks when possible (v7x megacore).
    n_b = 2 if (Bp % 16 == 0) else 1
    B_blk = Bp // n_b
    T_blk = _pick_t_blk(T, B_blk, Hp, I)
    n_t = T // T_blk

    # --- wrapper-side layout plumbing (free): pad, flatten x, transpose output back.
    x_p = jnp.zeros((T, Bp, I), f32).at[:, :B, :].set(x.astype(f32))
    x_r = (x_p.reshape(T, n_b, B_blk, I)
              .transpose(1, 0, 2, 3)
              .reshape(n_b, T * B_blk, I))                 # rows: t-major, b-minor
    h0_p = jnp.zeros((Bp, Hp), f32).at[:B, :H].set(h0[0].astype(f32))
    wih_t = jnp.zeros((I, Hp), f32).at[:, :H].set(w_ih.T.astype(f32))
    whh_t = jnp.zeros((Hp, Hp), f32).at[:H, :H].set(w_hh.T.astype(f32))
    bias = jnp.zeros((1, Hp), f32).at[0, :H].set((b_ih + b_hh).astype(f32))
    wlin_r = jnp.zeros((1, Hp), f32).at[0, :H].set(w_lin[0].astype(f32))
    blin = b_lin.reshape(1, 1).astype(f32)

    out_r, hn_p = pl.pallas_call(
        rnn_kernel,
        out_shape=(
            jax.ShapeDtypeStruct((n_b * n_t, B_blk, T_blk), f32),   # linear(Y), lane-dense
            jax.ShapeDtypeStruct((Bp, Hp), f32),                    # final hidden state
        ),
        grid_spec=pltpu.PrefetchScalarGridSpec(
            num_scalar_prefetch=0,
            grid=(n_b, n_t),
            in_specs=[
                pl.BlockSpec((None, T_blk * B_blk, I), lambda b, t: (b, t, 0)),  # x chunk
                pl.BlockSpec((B_blk, Hp), lambda b, t: (b, 0)),                  # h0
                pl.BlockSpec((I, Hp), lambda b, t: (0, 0)),                      # W_ih^T
                pl.BlockSpec((Hp, Hp), lambda b, t: (0, 0)),                     # W_hh^T
                pl.BlockSpec((1, Hp), lambda b, t: (0, 0)),                      # b_ih+b_hh
                pl.BlockSpec((1, Hp), lambda b, t: (0, 0)),                      # W_lin row
                pl.BlockSpec(memory_space=pltpu.MemorySpace.SMEM),               # b_lin
            ],
            out_specs=[
                pl.BlockSpec((None, B_blk, T_blk), lambda b, t: (b * n_t + t, 0, 0)),
                pl.BlockSpec((B_blk, Hp), lambda b, t: (b, 0)),
            ],
            scratch_shapes=[
                pltpu.VMEM((B_blk, Hp), jnp.float32),            # recurrent h (per chunk)
                pltpu.VMEM((T_blk * B_blk, Hp), jnp.float32),    # hoisted x projection
            ],
        ),
        compiler_params=pltpu.CompilerParams(
            # batch blocks are independent (megacore); time carries the recurrent state.
            dimension_semantics=("parallel", "arbitrary"),
            vmem_limit_bytes=48 * 1024 * 1024,
        ),
    )(x_r, h0_p, wih_t, whh_t, bias, wlin_r, blin)

    # Undo the lane-dense packing: (n_b*n_t, B_blk, T_blk) -> (T, B, 1).
    out = (out_r.reshape(n_b, n_t, B_blk, T_blk)
                .transpose(1, 3, 0, 2)                     # (n_t, T_blk, n_b, B_blk)
                .reshape(T, Bp))[:, :B, None].astype(x.dtype)
    hn = hn_p[:B, :H][None].astype(x.dtype)
    return out, hn


def rnn_reference(x, h0, w_ih, w_hh, b_ih, b_hh, w_lin, b_lin):
    def step(h, x_t):
        h_new = jnp.tanh(x_t @ w_ih.T + b_ih + h @ w_hh.T + b_hh)
        return h_new, h_new
    h_last, ys = jax.lax.scan(step, h0[0], x)
    out = ys @ w_lin.T + b_lin
    return out, h_last[None]


if __name__ == "__main__":
    T, B, I, H = 8, 2, 4, 32

    key = jax.random.PRNGKey(0)
    ks = jax.random.split(key, 8)
    bound = 1.0 / np.sqrt(H)   # PyTorch nn.RNN / nn.Linear default uniform init

    x = jax.random.normal(ks[0], (T, B, I), dtype=jnp.float32)
    h0 = jax.random.normal(ks[1], (1, B, H), dtype=jnp.float32)

    w_ih = jax.random.uniform(ks[2], (H, I), minval=-bound, maxval=bound)
    w_hh = jax.random.uniform(ks[3], (H, H), minval=-bound, maxval=bound)
    b_ih = jax.random.uniform(ks[4], (H,), minval=-bound, maxval=bound)
    b_hh = jax.random.uniform(ks[5], (H,), minval=-bound, maxval=bound)
    w_lin = jax.random.uniform(ks[6], (1, H), minval=-bound, maxval=bound)
    b_lin = jax.random.uniform(ks[7], (1,), minval=-bound, maxval=bound)

    out, state = rnn_forward(x, h0, w_ih, w_hh, b_ih, b_hh, w_lin, b_lin)
    out = jax.block_until_ready(out)
    state = jax.block_until_ready(state)

    out_ref, state_ref = rnn_reference(x, h0, w_ih, w_hh, b_ih, b_hh, w_lin, b_lin)
    np.testing.assert_allclose(np.asarray(out), np.asarray(out_ref), rtol=1e-5, atol=1e-5)
    np.testing.assert_allclose(np.asarray(state), np.asarray(state_ref), rtol=1e-5, atol=1e-5)

    assert out.shape == (T, B, 1) and state.shape == (1, B, H)
    print("KERNEL_OK")
</pallas_src>

<mosaic_0001>
module attributes {stable_mosaic.version = 11 : i64} {
  func.func @rnn_kernel(%arg0: i32, %arg1: i32, %arg2: memref<1x64x4xf32, #tpu.memory_space<vmem>>, %arg3: memref<8x128xf32, #tpu.memory_space<vmem>>, %arg4: memref<4x128xf32, #tpu.memory_space<vmem>>, %arg5: memref<128x128xf32, #tpu.memory_space<vmem>>, %arg6: memref<1x128xf32, #tpu.memory_space<vmem>>, %arg7: memref<1x128xf32, #tpu.memory_space<vmem>>, %arg8: memref<1x1xf32, #tpu.memory_space<smem>>, %arg9: memref<1x8x8xf32, #tpu.memory_space<vmem>>, %arg10: memref<8x128xf32, #tpu.memory_space<vmem>>, %arg11: memref<8x128xf32, #tpu.memory_space<vmem>>, %arg12: memref<64x128xf32, #tpu.memory_space<vmem>>) attributes {dimension_semantics = [#tpu.dimension_semantics<parallel>, #tpu.dimension_semantics<arbitrary>], iteration_bounds = array<i64: 1, 1>, scalar_prefetch = 0 : i64, scratch_operands = 2 : i64, tpu.core_type = #tpu.core_type<tc>, window_params = [{transform_indices = @transform_0, window_bounds = array<i64: 1, 64, 4>}, {transform_indices = @transform_1, window_bounds = array<i64: 8, 128>}, {pipeline_mode = #tpu.pipeline_mode<synchronous>, transform_indices = @transform_2, window_bounds = array<i64: 4, 128>}, {pipeline_mode = #tpu.pipeline_mode<synchronous>, transform_indices = @transform_3, window_bounds = array<i64: 128, 128>}, {pipeline_mode = #tpu.pipeline_mode<synchronous>, transform_indices = @transform_4, window_bounds = array<i64: 1, 128>}, {pipeline_mode = #tpu.pipeline_mode<synchronous>, transform_indices = @transform_5, window_bounds = array<i64: 1, 128>}, {transform_indices = @transform_6, window_bounds = array<i64: 1, 1>}, {transform_indices = @transform_7, window_bounds = array<i64: 1, 8, 8>}, {transform_indices = @transform_8, window_bounds = array<i64: 8, 128>}]} {
    %c0_i32 = arith.constant 0 : i32
    %0 = arith.cmpi eq, %arg1, %c0_i32 : i32
    %1 = arith.extui %0 : i1 to i32
    %c0_i32_0 = arith.constant 0 : i32
    %2 = arith.cmpi ne, %1, %c0_i32_0 : i32
    scf.if %2 {
      %c0_72 = arith.constant 0 : index
      %c0_73 = arith.constant 0 : index
      %161 = vector.load %arg3[%c0_72, %c0_73] : memref<8x128xf32, #tpu.memory_space<vmem>>, vector<8x128xf32>
      %c0_74 = arith.constant 0 : index
      %c0_75 = arith.constant 0 : index
      %162 = vector.load %arg11[%c0_74, %c0_75] : memref<8x128xf32, #tpu.memory_space<vmem>>, vector<8x128xf32>
      tpu.vector_store %arg11[%c0_74, %c0_75], %161 {strides = array<i32>} : memref<8x128xf32, #tpu.memory_space<vmem>>, vector<8x128xf32>,
    } else {
    }
    %c0 = arith.constant 0 : index
    %c0_1 = arith.constant 0 : index
    %c0_2 = arith.constant 0 : index
    %3 = vector.load %arg2[%c0, %c0_1, %c0_2] : memref<1x64x4xf32, #tpu.memory_space<vmem>>, vector<1x64x4xf32>
    %4 = vector.shape_cast %3 : vector<1x64x4xf32> to vector<64x4xf32>
    %c0_3 = arith.constant 0 : index
    %c0_4 = arith.constant 0 : index
    %5 = vector.load %arg4[%c0_3, %c0_4] : memref<4x128xf32, #tpu.memory_space<vmem>>, vector<4x128xf32>
    %cst = arith.constant dense<0.000000e+00> : vector<64x128xf32>
    %6 = tpu.matmul %4, %5, %cst {dimension_numbers = #tpu.dot_dimension_numbers<[1], [0], [0], [1], [0, 0, 1, 1], [], []>} : vector<64x4xf32>, vector<4x128xf32>, vector<64x128xf32> -> vector<64x128xf32>
    %c0_5 = arith.constant 0 : index
    %c0_6 = arith.constant 0 : index
    %7 = vector.load %arg6[%c0_5, %c0_6] : memref<1x128xf32, #tpu.memory_space<vmem>>, vector<1x128xf32>
    %8 = vector.broadcast %7 : vector<1x128xf32> to vector<64x128xf32>
    %9 = arith.addf %6, %8 : vector<64x128xf32>
    %c0_7 = arith.constant 0 : index
    %c0_8 = arith.constant 0 : index
    %10 = vector.load %arg12[%c0_7, %c0_8] : memref<64x128xf32, #tpu.memory_space<vmem>>, vector<64x128xf32>
    tpu.vector_store %arg12[%c0_7, %c0_8], %9 {strides = array<i32>} : memref<64x128xf32, #tpu.memory_space<vmem>>, vector<64x128xf32>,
    %c0_9 = arith.constant 0 : index
    %c0_10 = arith.constant 0 : index
    %11 = vector.load %arg7[%c0_9, %c0_10] : memref<1x128xf32, #tpu.memory_space<vmem>>, vector<1x128xf32>
    %c0_11 = arith.constant 0 : index
    %c0_12 = arith.constant 0 : index
    %12 = memref.load %arg8[%c0_11, %c0_12] : memref<1x1xf32, #tpu.memory_space<smem>>
    %13 = tpu.iota {dimensions = array<i32: 1>} : vector<8x8xi32>
    %c0_13 = arith.constant 0 : index
    %c0_14 = arith.constant 0 : index
    %14 = vector.load %arg11[%c0_13, %c0_14] : memref<8x128xf32, #tpu.memory_space<vmem>>, vector<8x128xf32>
    %cst_15 = arith.constant 0.000000e+00 : f32
    %15 = vector.broadcast %cst_15 : f32 to vector<8x8xf32>
    %c0_i32_16 = arith.constant 0 : i32
    %c8_i32 = arith.constant 8 : i32
    %16 = arith.muli %c0_i32_16, %c8_i32 : i32
    %17 = tpu.assume_multiple %16, 8 : i32
    %18 = arith.index_cast %17 : i32 to index
    %c0_17 = arith.constant 0 : index
    %19 = vector.load %arg12[%18, %c0_17] : memref<64x128xf32, #tpu.memory_space<vmem>>, vector<8x128xf32>
    %c0_18 = arith.constant 0 : index
    %c0_19 = arith.constant 0 : index
    %20 = vector.load %arg5[%c0_18, %c0_19] : memref<128x128xf32, #tpu.memory_space<vmem>>, vector<128x128xf32>
    %cst_20 = arith.constant dense<0.000000e+00> : vector<8x128xf32>
    %21 = tpu.matmul %14, %20, %cst_20 {dimension_numbers = #tpu.dot_dimension_numbers<[1], [0], [0], [1], [0, 0, 1, 1], [], []>} : vector<8x128xf32>, vector<128x128xf32>, vector<8x128xf32> -> vector<8x128xf32>
    %22 = arith.addf %19, %21 : vector<8x128xf32>
    %23 = math.tanh %22 : vector<8x128xf32>
    %24 = vector.broadcast %11 : vector<1x128xf32> to vector<8x128xf32>
    %25 = arith.mulf %23, %24 : vector<8x128xf32>
    %cst_21 = arith.constant dense<0.000000e+00> : vector<8xf32>
    %26 = vector.multi_reduction <add>, %25, %cst_21 [1] : vector<8x128xf32> to vector<8xf32>
    %27 = vector.shape_cast %26 : vector<8xf32> to vector<8x1xf32>
    %28 = vector.broadcast %c0_i32_16 : i32 to vector<8x8xi32>
    %29 = arith.cmpi eq, %13, %28 : vector<8x8xi32>
    %30 = vector.shape_cast %27 : vector<8x1xf32> to vector<8x1xf32>
    %31 = vector.broadcast %30 : vector<8x1xf32> to vector<8x8xf32>
    %32 = arith.select %29, %31, %15 : vector<8x8xi1>, vector<8x8xf32>
    %c1_i32 = arith.constant 1 : i32
    %c8_i32_22 = arith.constant 8 : i32
    %33 = arith.muli %c1_i32, %c8_i32_22 : i32
    %34 = tpu.assume_multiple %33, 8 : i32
    %35 = arith.index_cast %34 : i32 to index
    %c0_23 = arith.constant 0 : index
    %36 = vector.load %arg12[%35, %c0_23] : memref<64x128xf32, #tpu.memory_space<vmem>>, vector<8x128xf32>
    %c0_24 = arith.constant 0 : index
    %c0_25 = arith.constant 0 : index
    %37 = vector.load %arg5[%c0_24, %c0_25] : memref<128x128xf32, #tpu.memory_space<vmem>>, vector<128x128xf32>
    %cst_26 = arith.constant dense<0.000000e+00> : vector<8x128xf32>
    %38 = tpu.matmul %23, %37, %cst_26 {dimension_numbers = #tpu.dot_dimension_numbers<[1], [0], [0], [1], [0, 0, 1, 1], [], []>} : vector<8x128xf32>, vector<128x128xf32>, vector<8x128xf32> -> vector<8x128xf32>
    %39 = arith.addf %36, %38 : vector<8x128xf32>
    %40 = math.tanh %39 : vector<8x128xf32>
    %41 = vector.broadcast %11 : vector<1x128xf32> to vector<8x128xf32>
    %42 = arith.mulf %40, %41 : vector<8x128xf32>
    %cst_27 = arith.constant dense<0.000000e+00> : vector<8xf32>
    %43 = vector.multi_reduction <add>, %42, %cst_27 [1] : vector<8x128xf32> to vector<8xf32>
    %44 = vector.shape_cast %43 : vector<8xf32> to vector<8x1xf32>
    %45 = vector.broadcast %c1_i32 : i32 to vector<8x8xi32>
    %46 = arith.cmpi eq, %13, %45 : vector<8x8xi32>
    %47 = vector.shape_cast %44 : vector<8x1xf32> to vector<8x1xf32>
    %48 = vector.broadcast %47 : vector<8x1xf32> to vector<8x8xf32>
    %49 = arith.select %46, %48, %32 : vector<8x8xi1>, vector<8x8xf32>
    %c2_i32 = arith.constant 2 : i32
    %c8_i32_28 = arith.constant 8 : i32
    %50 = arith.muli %c2_i32, %c8_i32_28 : i32
    %51 = tpu.assume_multiple %50, 8 : i32
    %52 = arith.index_cast %51 : i32 to index
    %c0_29 = arith.constant 0 : index
    %53 = vector.load %arg12[%52, %c0_29] : memref<64x128xf32, #tpu.memory_space<vmem>>, vector<8x128xf32>
    %c0_30 = arith.constant 0 : index
    %c0_31 = arith.constant 0 : index
    %54 = vector.load %arg5[%c0_30, %c0_31] : memref<128x128xf32, #tpu.memory_space<vmem>>, vector<128x128xf32>
    %cst_32 = arith.constant dense<0.000000e+00> : vector<8x128xf32>
    %55 = tpu.matmul %40, %54, %cst_32 {dimension_numbers = #tpu.dot_dimension_numbers<[1], [0], [0], [1], [0, 0, 1, 1], [], []>} : vector<8x128xf32>, vector<128x128xf32>, vector<8x128xf32> -> vector<8x128xf32>
    %56 = arith.addf %53, %55 : vector<8x128xf32>
    %57 = math.tanh %56 : vector<8x128xf32>
    %58 = vector.broadcast %11 : vector<1x128xf32> to vector<8x128xf32>
    %59 = arith.mulf %57, %58 : vector<8x128xf32>
    %cst_33 = arith.constant dense<0.000000e+00> : vector<8xf32>
    %60 = vector.multi_reduction <add>, %59, %cst_33 [1] : vector<8x128xf32> to vector<8xf32>
    %61 = vector.shape_cast %60 : vector<8xf32> to vector<8x1xf32>
    %62 = vector.broadcast %c2_i32 : i32 to vector<8x8xi32>
    %63 = arith.cmpi eq, %13, %62 : vector<8x8xi32>
    %64 = vector.shape_cast %61 : vector<8x1xf32> to vector<8x1xf32>
    %65 = vector.broadcast %64 : vector<8x1xf32> to vector<8x8xf32>
    %66 = arith.select %63, %65, %49 : vector<8x8xi1>, vector<8x8xf32>
    %c3_i32 = arith.constant 3 : i32
    %c8_i32_34 = arith.constant 8 : i32
    %67 = arith.muli %c3_i32, %c8_i32_34 : i32
    %68 = tpu.assume_multiple %67, 8 : i32
    %69 = arith.index_cast %68 : i32 to index
    %c0_35 = arith.constant 0 : index
    %70 = vector.load %arg12[%69, %c0_35] : memref<64x128xf32, #tpu.memory_space<vmem>>, vector<8x128xf32>
    %c0_36 = arith.constant 0 : index
    %c0_37 = arith.constant 0 : index
    %71 = vector.load %arg5[%c0_36, %c0_37] : memref<128x128xf32, #tpu.memory_space<vmem>>, vector<128x128xf32>
    %cst_38 = arith.constant dense<0.000000e+00> : vector<8x128xf32>
    %72 = tpu.matmul %57, %71, %cst_38 {dimension_numbers = #tpu.dot_dimension_numbers<[1], [0], [0], [1], [0, 0, 1, 1], [], []>} : vector<8x128xf32>, vector<128x128xf32>, vector<8x128xf32> -> vector<8x128xf32>
    %73 = arith.addf %70, %72 : vector<8x128xf32>
    %74 = math.tanh %73 : vector<8x128xf32>
    %75 = vector.broadcast %11 : vector<1x128xf32> to vector<8x128xf32>
    %76 = arith.mulf %74, %75 : vector<8x128xf32>
    %cst_39 = arith.constant dense<0.000000e+00> : vector<8xf32>
    %77 = vector.multi_reduction <add>, %76, %cst_39 [1] : vector<8x128xf32> to vector<8xf32>
    %78 = vector.shape_cast %77 : vector<8xf32> to vector<8x1xf32>
    %79 = vector.broadcast %c3_i32 : i32 to vector<8x8xi32>
    %80 = arith.cmpi eq, %13, %79 : vector<8x8xi32>
    %81 = vector.shape_cast %78 : vector<8x1xf32> to vector<8x1xf32>
    %82 = vector.broadcast %81 : vector<8x1xf32> to vector<8x8xf32>
    %83 = arith.select %80, %82, %66 : vector<8x8xi1>, vector<8x8xf32>
    %c4_i32 = arith.constant 4 : i32
    %c8_i32_40 = arith.constant 8 : i32
    %84 = arith.muli %c4_i32, %c8_i32_40 : i32
    %85 = tpu.assume_multiple %84, 8 : i32
    %86 = arith.index_cast %85 : i32 to index
    %c0_41 = arith.constant 0 : index
    %87 = vector.load %arg12[%86, %c0_41] : memref<64x128xf32, #tpu.memory_space<vmem>>, vector<8x128xf32>
    %c0_42 = arith.constant 0 : index
    %c0_43 = arith.constant 0 : index
    %88 = vector.load %arg5[%c0_42, %c0_43] : memref<128x128xf32, #tpu.memory_space<vmem>>, vector<128x128xf32>
    %cst_44 = arith.constant dense<0.000000e+00> : vector<8x128xf32>
    %89 = tpu.matmul %74, %88, %cst_44 {dimension_numbers = #tpu.dot_dimension_numbers<[1], [0], [0], [1], [0, 0, 1, 1], [], []>} : vector<8x128xf32>, vector<128x128xf32>, vector<8x128xf32> -> vector<8x128xf32>
    %90 = arith.addf %87, %89 : vector<8x128xf32>
    %91 = math.tanh %90 : vector<8x128xf32>
    %92 = vector.broadcast %11 : vector<1x128xf32> to vector<8x128xf32>
    %93 = arith.mulf %91, %92 : vector<8x128xf32>
    %cst_45 = arith.constant dense<0.000000e+00> : vector<8xf32>
    %94 = vector.multi_reduction <add>, %93, %cst_45 [1] : vector<8x128xf32> to vector<8xf32>
    %95 = vector.shape_cast %94 : vector<8xf32> to vector<8x1xf32>
    %96 = vector.broadcast %c4_i32 : i32 to vector<8x8xi32>
    %97 = arith.cmpi eq, %13, %96 : vector<8x8xi32>
    %98 = vector.shape_cast %95 : vector<8x1xf32> to vector<8x1xf32>
    %99 = vector.broadcast %98 : vector<8x1xf32> to vector<8x8xf32>
    %100 = arith.select %97, %99, %83 : vector<8x8xi1>, vector<8x8xf32>
    %c5_i32 = arith.constant 5 : i32
    %c8_i32_46 = arith.constant 8 : i32
    %101 = arith.muli %c5_i32, %c8_i32_46 : i32
    %102 = tpu.assume_multiple %101, 8 : i32
    %103 = arith.index_cast %102 : i32 to index
    %c0_47 = arith.constant 0 : index
    %104 = vector.load %arg12[%103, %c0_47] : memref<64x128xf32, #tpu.memory_space<vmem>>, vector<8x128xf32>
    %c0_48 = arith.constant 0 : index
    %c0_49 = arith.constant 0 : index
    %105 = vector.load %arg5[%c0_48, %c0_49] : memref<128x128xf32, #tpu.memory_space<vmem>>, vector<128x128xf32>
    %cst_50 = arith.constant dense<0.000000e+00> : vector<8x128xf32>
    %106 = tpu.matmul %91, %105, %cst_50 {dimension_numbers = #tpu.dot_dimension_numbers<[1], [0], [0], [1], [0, 0, 1, 1], [], []>} : vector<8x128xf32>, vector<128x128xf32>, vector<8x128xf32> -> vector<8x128xf32>
    %107 = arith.addf %104, %106 : vector<8x128xf32>
    %108 = math.tanh %107 : vector<8x128xf32>
    %109 = vector.broadcast %11 : vector<1x128xf32> to vector<8x128xf32>
    %110 = arith.mulf %108, %109 : vector<8x128xf32>
    %cst_51 = arith.constant dense<0.000000e+00> : vector<8xf32>
    %111 = vector.multi_reduction <add>, %110, %cst_51 [1] : vector<8x128xf32> to vector<8xf32>
    %112 = vector.shape_cast %111 : vector<8xf32> to vector<8x1xf32>
    %113 = vector.broadcast %c5_i32 : i32 to vector<8x8xi32>
    %114 = arith.cmpi eq, %13, %113 : vector<8x8xi32>
    %115 = vector.shape_cast %112 : vector<8x1xf32> to vector<8x1xf32>
    %116 = vector.broadcast %115 : vector<8x1xf32> to vector<8x8xf32>
    %117 = arith.select %114, %116, %100 : vector<8x8xi1>, vector<8x8xf32>
    %c6_i32 = arith.constant 6 : i32
    %c8_i32_52 = arith.constant 8 : i32
    %118 = arith.muli %c6_i32, %c8_i32_52 : i32
    %119 = tpu.assume_multiple %118, 8 : i32
    %120 = arith.index_cast %119 : i32 to index
    %c0_53 = arith.constant 0 : index
    %121 = vector.load %arg12[%120, %c0_53] : memref<64x128xf32, #tpu.memory_space<vmem>>, vector<8x128xf32>
    %c0_54 = arith.constant 0 : index
    %c0_55 = arith.constant 0 : index
    %122 = vector.load %arg5[%c0_54, %c0_55] : memref<128x128xf32, #tpu.memory_space<vmem>>, vector<128x128xf32>
    %cst_56 = arith.constant dense<0.000000e+00> : vector<8x128xf32>
    %123 = tpu.matmul %108, %122, %cst_56 {dimension_numbers = #tpu.dot_dimension_numbers<[1], [0], [0], [1], [0, 0, 1, 1], [], []>} : vector<8x128xf32>, vector<128x128xf32>, vector<8x128xf32> -> vector<8x128xf32>
    %124 = arith.addf %121, %123 : vector<8x128xf32>
    %125 = math.tanh %124 : vector<8x128xf32>
    %126 = vector.broadcast %11 : vector<1x128xf32> to vector<8x128xf32>
    %127 = arith.mulf %125, %126 : vector<8x128xf32>
    %cst_57 = arith.constant dense<0.000000e+00> : vector<8xf32>
    %128 = vector.multi_reduction <add>, %127, %cst_57 [1] : vector<8x128xf32> to vector<8xf32>
    %129 = vector.shape_cast %128 : vector<8xf32> to vector<8x1xf32>
    %130 = vector.broadcast %c6_i32 : i32 to vector<8x8xi32>
    %131 = arith.cmpi eq, %13, %130 : vector<8x8xi32>
    %132 = vector.shape_cast %129 : vector<8x1xf32> to vector<8x1xf32>
    %133 = vector.broadcast %132 : vector<8x1xf32> to vector<8x8xf32>
    %134 = arith.select %131, %133, %117 : vector<8x8xi1>, vector<8x8xf32>
    %c7_i32 = arith.constant 7 : i32
    %c8_i32_58 = arith.constant 8 : i32
    %135 = arith.muli %c7_i32, %c8_i32_58 : i32
    %136 = tpu.assume_multiple %135, 8 : i32
    %137 = arith.index_cast %136 : i32 to index
    %c0_59 = arith.constant 0 : index
    %138 = vector.load %arg12[%137, %c0_59] : memref<64x128xf32, #tpu.memory_space<vmem>>, vector<8x128xf32>
    %c0_60 = arith.constant 0 : index
    %c0_61 = arith.constant 0 : index
    %139 = vector.load %arg5[%c0_60, %c0_61] : memref<128x128xf32, #tpu.memory_space<vmem>>, vector<128x128xf32>
    %cst_62 = arith.constant dense<0.000000e+00> : vector<8x128xf32>
    %140 = tpu.matmul %125, %139, %cst_62 {dimension_numbers = #tpu.dot_dimension_numbers<[1], [0], [0], [1], [0, 0, 1, 1], [], []>} : vector<8x128xf32>, vector<128x128xf32>, vector<8x128xf32> -> vector<8x128xf32>
    %141 = arith.addf %138, %140 : vector<8x128xf32>
    %142 = math.tanh %141 : vector<8x128xf32>
    %143 = vector.broadcast %11 : vector<1x128xf32> to vector<8x128xf32>
    %144 = arith.mulf %142, %143 : vector<8x128xf32>
    %cst_63 = arith.constant dense<0.000000e+00> : vector<8xf32>
    %145 = vector.multi_reduction <add>, %144, %cst_63 [1] : vector<8x128xf32> to vector<8xf32>
    %146 = vector.shape_cast %145 : vector<8xf32> to vector<8x1xf32>
    %147 = vector.broadcast %c7_i32 : i32 to vector<8x8xi32>
    %148 = arith.cmpi eq, %13, %147 : vector<8x8xi32>
    %149 = vector.shape_cast %146 : vector<8x1xf32> to vector<8x1xf32>
    %150 = vector.broadcast %149 : vector<8x1xf32> to vector<8x8xf32>
    %151 = arith.select %148, %150, %134 : vector<8x8xi1>, vector<8x8xf32>
    %c8_i32_64 = arith.constant 8 : i32
    %c0_65 = arith.constant 0 : index
    %c0_66 = arith.constant 0 : index
    %152 = vector.load %arg11[%c0_65, %c0_66] : memref<8x128xf32, #tpu.memory_space<vmem>>, vector<8x128xf32>
    tpu.vector_store %arg11[%c0_65, %c0_66], %142 {strides = array<i32>} : memref<8x128xf32, #tpu.memory_space<vmem>>, vector<8x128xf32>,
    %153 = vector.broadcast %12 : f32 to vector<8x8xf32>
    %154 = arith.addf %151, %153 : vector<8x8xf32>
    %c0_67 = arith.constant 0 : index
    %c0_68 = arith.constant 0 : index
    %c0_69 = arith.constant 0 : index
    %155 = vector.load %arg9[%c0_67, %c0_68, %c0_69] : memref<1x8x8xf32, #tpu.memory_space<vmem>>, vector<1x8x8xf32>
    %156 = vector.shape_cast %155 : vector<1x8x8xf32> to vector<8x8xf32>
    %157 = vector.shape_cast %154 : vector<8x8xf32> to vector<1x8x8xf32>
    tpu.vector_store %arg9[%c0_67, %c0_68, %c0_69], %157 {strides = array<i32>} : memref<1x8x8xf32, #tpu.memory_space<vmem>>, vector<1x8x8xf32>,
    %c0_i32_70 = arith.constant 0 : i32
    %158 = arith.cmpi eq, %arg1, %c0_i32_70 : i32
    %159 = arith.extui %158 : i1 to i32
    %c0_i32_71 = arith.constant 0 : i32
    %160 = arith.cmpi ne, %159, %c0_i32_71 : i32
    scf.if %160 {
      %c0_72 = arith.constant 0 : index
      %c0_73 = arith.constant 0 : index
      %161 = vector.load %arg10[%c0_72, %c0_73] : memref<8x128xf32, #tpu.memory_space<vmem>>, vector<8x128xf32>
      tpu.vector_store %arg10[%c0_72, %c0_73], %142 {strides = array<i32>} : memref<8x128xf32, #tpu.memory_space<vmem>>, vector<8x128xf32>,
    } else {
    }
    return
  }
  func.func @transform_0(%arg0: i32, %arg1: i32) -> (i32, i32, i32) {
    %c0_i32 = arith.constant 0 : i32
    %c0_i32_0 = arith.constant 0 : i32
    return %arg0, %arg1, %c0_i32 : i32, i32, i32
  }
  func.func @transform_1(%arg0: i32, %arg1: i32) -> (i32, i32) {
    %c0_i32 = arith.constant 0 : i32
    %c0_i32_0 = arith.constant 0 : i32
    return %arg0, %c0_i32 : i32, i32
  }
  func.func @transform_2(%arg0: i32, %arg1: i32) -> (i32, i32) {
    %c0_i32 = arith.constant 0 : i32
    %c0_i32_0 = arith.constant 0 : i32
    %c0_i32_1 = arith.constant 0 : i32
    return %c0_i32, %c0_i32_0 : i32, i32
  }
  func.func @transform_3(%arg0: i32, %arg1: i32) -> (i32, i32) {
    %c0_i32 = arith.constant 0 : i32
    %c0_i32_0 = arith.constant 0 : i32
    %c0_i32_1 = arith.constant 0 : i32
    return %c0_i32, %c0_i32_0 : i32, i32
  }
  func.func @transform_4(%arg0: i32, %arg1: i32) -> (i32, i32) {
    %c0_i32 = arith.constant 0 : i32
    %c0_i32_0 = arith.constant 0 : i32
    %c0_i32_1 = arith.constant 0 : i32
    return %c0_i32, %c0_i32_0 : i32, i32
  }
  func.func @transform_5(%arg0: i32, %arg1: i32) -> (i32, i32) {
    %c0_i32 = arith.constant 0 : i32
    %c0_i32_0 = arith.constant 0 : i32
    %c0_i32_1 = arith.constant 0 : i32
    return %c0_i32, %c0_i32_0 : i32, i32
  }
  func.func @transform_6(%arg0: i32, %arg1: i32) -> (i32, i32) {
    %c0_i32 = arith.constant 0 : i32
    %c0_i32_0 = arith.constant 0 : i32
    %c0_i32_1 = arith.constant 0 : i32
    return %c0_i32, %c0_i32_0 : i32, i32
  }
  func.func @transform_7(%arg0: i32, %arg1: i32) -> (i32, i32, i32) {
    %c1_i32 = arith.constant 1 : i32
    %0 = arith.muli %arg0, %c1_i32 : i32
    %1 = arith.addi %0, %arg1 : i32
    %c0_i32 = arith.constant 0 : i32
    %c0_i32_0 = arith.constant 0 : i32
    %c0_i32_1 = arith.constant 0 : i32
    return %1, %c0_i32, %c0_i32_0 : i32, i32, i32
  }
  func.func @transform_8(%arg0: i32, %arg1: i32) -> (i32, i32) {
    %c0_i32 = arith.constant 0 : i32
    %c0_i32_0 = arith.constant 0 : i32
    return %arg0, %c0_i32 : i32, i32
  }
}

</mosaic_0001>

<llo_original>
// kernel: rnn_forward.1
$region0: #{rnn_forward.1}
  #allocation0 [shape = 'u32[]', space=smem, size = 0x4, offset = 0x4, fixed_abs, tag = 'smem constant byte address 0x4 - core index']
  #allocation1 [shape = 'u32[144,128]{1,0:T(1,128)}', space=vmem, size = 0x12000, scoped, tag = 'internal scratch']
  #allocation2 [shape = 'f32[8,128]{1,0:T(8,128)}', space=vmem, size = 0x1000, scoped, tag = 'scratch operand']
  #allocation3 [shape = 'f32[64,128]{1,0:T(8,128)}', space=vmem, size = 0x8000, scoped, tag = 'scratch operand']
  #allocation4 [shape = 'f32[1,1]{1,0:T(1,128)S(6)}', space=smem, size = 0x200, scoped, tag = 'scoped memory for rnn_forward.1']
  %s0 = inlined_call_operand.vmem [shape: f32[1,64,4], index: 0, kind: input, shape index: {}]
  %s1 = inlined_call_operand.vmem [shape: f32[8,128], index: 1, kind: input, shape index: {}]
  %s2 = inlined_call_operand.vmem [shape: f32[4,128], index: 2, kind: input, shape index: {}]
  %s3 = inlined_call_operand.vmem [shape: f32[128,128], index: 3, kind: input, shape index: {}]
  %s4 = inlined_call_operand.vmem [shape: f32[1,128], index: 4, kind: input, shape index: {}]
  %s5 = inlined_call_operand.vmem [shape: f32[1,128], index: 5, kind: input, shape index: {}]
  %s6 = inlined_call_operand.<no memory space> [shape: f32[1,1], index: 6, kind: input, shape index: {}]
  %s7 = inlined_call_operand.vmem [shape: f32[1,8,8], index: 7, kind: output, shape index: {0}]
  %s8 = inlined_call_operand.vmem [shape: f32[8,128], index: 8, kind: output, shape index: {1}]
  %9 = xla_tuple %s7, %s8
  %s10 = sld [smem:[#allocation0]]
  $region54: #{rnn_forward.1} parent=0
    _
  %s12 = ssub.s32 1, %s10
  %s13 = scalar_select 0, %s12, %s10
  %14 = sst [smem:[#allocation4]] %s6
  // Predicated region
  $region2: #{rnn_forward.1} parent=0 // pred_check
    _
  $region3: #{rnn_forward.1} parent=0 // pred_check_branch
    %16 = sbr.rel (0) target = $region5
  $region4: #{rnn_forward.1} parent=0 // pred_region
    _
  $region5: #{rnn_forward.1} parent=0 // pred_fallthru
    _
  // Predicated region
  $region6: #{rnn_forward.1} parent=0 // pred_check
    _
  $region7: #{rnn_forward.1} parent=0 // pred_check_branch
    %18 = sbr.rel (0) target = $region9
  $region8: #{rnn_forward.1} parent=0 // pred_region
    _
  $region9: #{rnn_forward.1} parent=0 // pred_fallthru
    _
  // Predicated region
  $region10: #{rnn_forward.1} parent=0 // pred_check
    _
  $region11: #{rnn_forward.1} parent=0 // pred_check_branch
    %20 = sbr.rel (0) target = $region13
  $region12: #{rnn_forward.1} parent=0 // pred_region
    _
  $region13: #{rnn_forward.1} parent=0 // pred_fallthru
    _
  // Predicated region
  $region14: #{rnn_forward.1} parent=0 // pred_check
    _
  $region15: #{rnn_forward.1} parent=0 // pred_check_branch
    %22 = sbr.rel (0) target = $region17
  $region16: #{rnn_forward.1} parent=0 // pred_region
    _
  $region17: #{rnn_forward.1} parent=0 // pred_fallthru
    _
  // Predicated region
  $region18: #{rnn_forward.1} parent=0 // pred_check
    _
  $region19: #{rnn_forward.1} parent=0 // pred_check_branch
    %24 = sbr.rel (0) target = $region21
  $region20: #{rnn_forward.1} parent=0 // pred_region
    _
  $region21: #{rnn_forward.1} parent=0 // pred_fallthru
    _
  // Predicated region
  $region22: #{rnn_forward.1} parent=0 // pred_check
    _
  $region23: #{rnn_forward.1} parent=0 // pred_check_branch
    %26 = sbr.rel (0) target = $region25
  $region24: #{rnn_forward.1} parent=0 // pred_region
    _
  $region25: #{rnn_forward.1} parent=0 // pred_fallthru
    _
  // Predicated region
  $region26: #{rnn_forward.1} parent=0 // pred_check
    _
  $region27: #{rnn_forward.1} parent=0 // pred_check_branch
    %28 = sbr.rel (0) target = $region29
  $region28: #{rnn_forward.1} parent=0 // pred_region
    _
  $region29: #{rnn_forward.1} parent=0 // pred_fallthru
    _
  %s29 = sadd.s32 0, 0
  %p30 = scmp.lt.s32.totalorder %s29, 0
  %s31 = scalar_select %p30, %s29, 0
  %s32 = smul.addr %s31, 8
  %s33 = scalar_lea.vmem %s7, %s32
  %s34 = sadd.s32 0, 0
  %p35 = scmp.lt.s32.totalorder %s34, 0
  %s36 = scalar_select %p35, %s34, 0
  %s37 = smul.addr %s36, 8
  %s38 = scalar_lea.vmem %s7, %s37
  %s39 = sadd.s32 0, 0
  %p40 = scmp.eq.s32.totalorder 0, 0
  // Predicated region
  $region30: #{rnn_forward.1} parent=0 // pred_check
    %p41 = pneg %p40
  $region31: #{rnn_forward.1} parent=0 // pred_check_branch
    %43 = sbr.rel (%p41) target = $region33
  $region32: #{rnn_forward.1} parent=0 // pred_region
    %v44 = vld [vmem:[%s1] sm:$0xff]
    %45 = vst [vmem:[#allocation2] sm:$0xff] %v44
  $region33: #{rnn_forward.1} parent=0 // pred_fallthru
    _
  %v46 = vld [vmem:[%s0] sm:$0xff]
  %v47 = vld [vmem:[%s0 + $0x8] sm:$0xff]
  %v48 = vld [vmem:[%s0 + $0x10] sm:$0xff]
  %v49 = vld [vmem:[%s0 + $0x18] sm:$0xff]
  %v50 = vld [vmem:[%s0 + $0x20] sm:$0xff]
  %v51 = vld [vmem:[%s0 + $0x28] sm:$0xff]
  %v52 = vld [vmem:[%s0 + $0x30] sm:$0xff]
  %v53 = vld [vmem:[%s0 + $0x38] sm:$0xff]
  %v54 = vld [vmem:[%s2] sm:$0xf]
  %v55 = vld [vmem:[%s4] sm:$0x1]
  %v57 = vlaneseq
  %v58 = vshrl.u32 %v57, 7
  %v59 = vsub.s32 0, %v58
  %v60 = vrot.slane %v55, %v59
  %vm62 = vcmask 31744
  %v64 = vsel %vm62, %v46, 0
  %v67 = vsel %vm62, %v47, 0
  %v70 = vsel %vm62, %v48, 0
  %v73 = vsel %vm62, %v49, 0
  %v76 = vsel %vm62, %v50, 0
  %v79 = vsel %vm62, %v51, 0
  %v82 = vsel %vm62, %v52, 0
  %v85 = vsel %vm62, %v53, 0
  %vm87 = vcmask 1043456
  %v89 = vsel %vm87, %v54, 0
  %91 = vmatprep.subr.mxu0 0.0
  %92 = vmatpush1.msra.mxu0 %v89
  %93 = vmatprep.subr.mxu0 0.0
  %94 = vmatpush1.msra.mxu0 0.0
  %95 = vmatprep.subr.mxu0 0.0
  %96 = vmatpush1.msra.mxu0 0.0
  %97 = vmatprep.subr.mxu0 0.0
  %98 = vmatpush1.msra.mxu0 0.0
  %99 = vmatprep.subr.mxu0 0.0
  %100 = vmatpush1.msra.mxu0 0.0
  %101 = vmatprep.subr.mxu0 0.0
  %102 = vmatpush1.msra.mxu0 0.0
  %103 = vmatprep.subr.mxu0 0.0
  %104 = vmatpush1.msra.mxu0 0.0
  %105 = vmatprep.subr.mxu0 0.0
  %106 = vmatpush1.msra.mxu0 0.0
  %107 = vmatprep.subr.mxu0 0.0
  %108 = vmatpush1.msra.mxu0 0.0
  %109 = vmatprep.subr.mxu0 0.0
  %110 = vmatpush1.msra.mxu0 0.0
  %111 = vmatprep.subr.mxu0 0.0
  %112 = vmatpush1.msra.mxu0 0.0
  %113 = vmatprep.subr.mxu0 0.0
  %114 = vmatpush1.msra.mxu0 0.0
  %115 = vmatprep.subr.mxu0 0.0
  %116 = vmatpush1.msra.mxu0 0.0
  %117 = vmatprep.subr.mxu0 0.0
  %118 = vmatpush1.msra.mxu0 0.0
  %119 = vmatprep.subr.mxu0 0.0
  %120 = vmatpush1.msra.mxu0 0.0
  %121 = vmatprep.subr.mxu0 0.0
  %122 = vmatpush1.msra.mxu0 0.0
  %123 = vmatprep.subr.mxu0 0.0
  %124 = vmatpush1.msra.mxu0 0.0
  %125 = vmatprep.subr.mxu0 0.0
  %126 = vmatpush1.msra.mxu0 0.0
  %127 = vmatprep.subr.mxu0 0.0
  %128 = vmatpush1.msra.mxu0 0.0
  %129 = vmatprep.subr.mxu0 0.0
  %130 = vmatpush1.msra.mxu0 0.0
  %131 = vmatprep.subr.mxu0 0.0
  %132 = vmatpush1.msra.mxu0 0.0
  %133 = vmatprep.subr.mxu0 0.0
  %134 = vmatpush1.msra.mxu0 0.0
  %135 = vmatprep.subr.mxu0 0.0
  %136 = vmatpush1.msra.mxu0 0.0
  %137 = vmatprep.subr.mxu0 0.0
  %138 = vmatpush1.msra.mxu0 0.0
  %139 = vmatprep.subr.mxu0 0.0
  %140 = vmatpush1.msra.mxu0 0.0
  %141 = vmatprep.subr.mxu0 0.0
  %142 = vmatpush1.msra.mxu0 0.0
  %143 = vmatprep.subr.mxu0 0.0
  %144 = vmatpush1.msra.mxu0 0.0
  %145 = vmatprep.subr.mxu0 0.0
  %146 = vmatpush1.msra.mxu0 0.0
  %147 = vmatprep.subr.mxu0 0.0
  %148 = vmatpush1.msra.mxu0 0.0
  %149 = vmatprep.subr.mxu0 0.0
  %150 = vmatpush1.msra.mxu0 0.0
  %151 = vmatprep.subr.mxu0 0.0
  %152 = vmatpush1.msra.mxu0 0.0
  %153 = vmatprep.subr.mxu0 0.0
  %154 = vmatpush1.msra.mxu0 0.0
  %155 = vmatprep.mubr.f32.mxu0 0.0
  %156 = vmatmul.mubr.f32.gmra.mrb[0].mxu0 %v64
  %v157 = vpop.f32.mrb[0].mxu0
  %v158 = vadd.f32 %v60, %v157
  %v159 = vpop.f32.mrb[0].mxu0
  %160 = vmatprep.mubr.f32.mxu0 0.0
  %161 = vmatmul.mubr.f32.gmra.mrb[0].mxu0 %v67
  %v162 = vpop.f32.mrb[0].mxu0
  %v163 = vadd.f32 %v60, %v162
  %v164 = vpop.f32.mrb[0].mxu0
  %165 = vmatprep.mubr.f32.mxu0 0.0
  %166 = vmatmul.mubr.f32.gmra.mrb[0].mxu0 %v70
  %v167 = vpop.f32.mrb[0].mxu0
  %v168 = vadd.f32 %v60, %v167
  %v169 = vpop.f32.mrb[0].mxu0
  %170 = vmatprep.mubr.f32.mxu0 0.0
  %171 = vmatmul.mubr.f32.gmra.mrb[0].mxu0 %v73
  %v172 = vpop.f32.mrb[0].mxu0
  %v173 = vadd.f32 %v60, %v172
  %v174 = vpop.f32.mrb[0].mxu0
  %175 = vmatprep.mubr.f32.mxu0 0.0
  %176 = vmatmul.mubr.f32.gmra.mrb[0].mxu0 %v76
  %v177 = vpop.f32.mrb[0].mxu0
  %v178 = vadd.f32 %v60, %v177
  %v179 = vpop.f32.mrb[0].mxu0
  %180 = vmatprep.mubr.f32.mxu0 0.0
  %181 = vmatmul.mubr.f32.gmra.mrb[0].mxu0 %v79
  %v182 = vpop.f32.mrb[0].mxu0
  %v183 = vadd.f32 %v60, %v182
  %v184 = vpop.f32.mrb[0].mxu0
  %185 = vmatprep.mubr.f32.mxu0 0.0
  %186 = vmatmul.mubr.f32.gmra.mrb[0].mxu0 %v82
  %v187 = vpop.f32.mrb[0].mxu0
  %v188 = vadd.f32 %v60, %v187
  %v189 = vpop.f32.mrb[0].mxu0
  %190 = vmatprep.mubr.f32.mxu0 0.0
  %191 = vmatmul.mubr.f32.gmra.mrb[0].mxu0 %v85
  %v192 = vpop.f32.mrb[0].mxu0
  %v193 = vadd.f32 %v60, %v192
  %v194 = vpop.f32.mrb[0].mxu0
  %195 = vdwg.mxu0
  %196 = vst [vmem:[#allocation3] sm:$0xff] %v158
  %197 = vst [vmem:[#allocation3 + $0x8] sm:$0xff] %v163
  %198 = vst [vmem:[#allocation3 + $0x10] sm:$0xff] %v168
  %199 = vst [vmem:[#allocation3 + $0x18] sm:$0xff] %v173
  %200 = vst [vmem:[#allocation3 + $0x20] sm:$0xff] %v178
  %201 = vst [vmem:[#allocation3 + $0x28] sm:$0xff] %v183
  %202 = vst [vmem:[#allocation3 + $0x30] sm:$0xff] %v188
  %203 = vst [vmem:[#allocation3 + $0x38] sm:$0xff] %v193
  %v204 = vld [vmem:[%s5] sm:$0x1]
  %s205 = sld [smem:[#allocation4]]
  %v206 = vlaneseq
  %v207 = vand.u32 %v206, 127
  %v208 = vld [vmem:[#allocation2] sm:$0xff]
  %v209 = vld [vmem:[#allocation3] sm:$0xff]
  %v210 = vld [vmem:[%s3] sm:$0xff]
  %v211 = vld [vmem:[%s3 + $0x8] sm:$0xff]
  %v212 = vld [vmem:[%s3 + $0x10] sm:$0xff]
  %v213 = vld [vmem:[%s3 + $0x18] sm:$0xff]
  %v214 = vld [vmem:[%s3 + $0x20] sm:$0xff]
  %v215 = vld [vmem:[%s3 + $0x28] sm:$0xff]
  %v216 = vld [vmem:[%s3 + $0x30] sm:$0xff]
  %v217 = vld [vmem:[%s3 + $0x38] sm:$0xff]
  %v218 = vld [vmem:[%s3 + $0x40] sm:$0xff]
  %v219 = vld [vmem:[%s3 + $0x48] sm:$0xff]
  %v220 = vld [vmem:[%s3 + $0x50] sm:$0xff]
  %v221 = vld [vmem:[%s3 + $0x58] sm:$0xff]
  %v222 = vld [vmem:[%s3 + $0x60] sm:$0xff]
  %v223 = vld [vmem:[%s3 + $0x68] sm:$0xff]
  %v224 = vld [vmem:[%s3 + $0x70] sm:$0xff]
  %v225 = vld [vmem:[%s3 + $0x78] sm:$0xff]
  %226 = vmatprep.subr.mxu0 0.0
  %227 = vmatpush1.msra.mxu0 %v210
  %228 = vmatprep.subr.mxu0 0.0
  %229 = vmatpush1.msra.mxu0 %v211
  %230 = vmatprep.subr.mxu0 0.0
  %231 = vmatpush1.msra.mxu0 %v212
  %232 = vmatprep.subr.mxu0 0.0
  %233 = vmatpush1.msra.mxu0 %v213
  %234 = vmatprep.subr.mxu0 0.0
  %235 = vmatpush1.msra.mxu0 %v214
  %236 = vmatprep.subr.mxu0 0.0
  %237 = vmatpush1.msra.mxu0 %v215
  %238 = vmatprep.subr.mxu0 0.0
  %239 = vmatpush1.msra.mxu0 %v216
  %240 = vmatprep.subr.mxu0 0.0
  %241 = vmatpush1.msra.mxu0 %v217
  %242 = vmatprep.subr.mxu0 0.0
  %243 = vmatpush1.msra.mxu0 %v218
  %244 = vmatprep.subr.mxu0 0.0
  %245 = vmatpush1.msra.mxu0 %v219
  %246 = vmatprep.subr.mxu0 0.0
  %247 = vmatpush1.msra.mxu0 %v220
  %248 = vmatprep.subr.mxu0 0.0
  %249 = vmatpush1.msra.mxu0 %v221
  %250 = vmatprep.subr.mxu0 0.0
  %251 = vmatpush1.msra.mxu0 %v222
  %252 = vmatprep.subr.mxu0 0.0
  %253 = vmatpush1.msra.mxu0 %v223
  %254 = vmatprep.subr.mxu0 0.0
  %255 = vmatpush1.msra.mxu0 %v224
  %256 = vmatprep.subr.mxu0 0.0
  %257 = vmatpush1.msra.mxu0 %v225
  %258 = vmatprep.subr.mxu0 0.0
  %259 = vmatpush1.msra.mxu0 0.0
  %260 = vmatprep.subr.mxu0 0.0
  %261 = vmatpush1.msra.mxu0 0.0
  %262 = vmatprep.subr.mxu0 0.0
  %263 = vmatpush1.msra.mxu0 0.0
  %264 = vmatprep.subr.mxu0 0.0
  %265 = vmatpush1.msra.mxu0 0.0
  %266 = vmatprep.subr.mxu0 0.0
  %267 = vmatpush1.msra.mxu0 0.0
  %268 = vmatprep.subr.mxu0 0.0
  %269 = vmatpush1.msra.mxu0 0.0
  %270 = vmatprep.subr.mxu0 0.0
  %271 = vmatpush1.msra.mxu0 0.0
  %272 = vmatprep.subr.mxu0 0.0
  %273 = vmatpush1.msra.mxu0 0.0
  %274 = vmatprep.subr.mxu0 0.0
  %275 = vmatpush1.msra.mxu0 0.0
  %276 = vmatprep.subr.mxu0 0.0
  %277 = vmatpush1.msra.mxu0 0.0
  %278 = vmatprep.subr.mxu0 0.0
  %279 = vmatpush1.msra.mxu0 0.0
  %280 = vmatprep.subr.mxu0 0.0
  %281 = vmatpush1.msra.mxu0 0.0
  %282 = vmatprep.subr.mxu0 0.0
  %283 = vmatpush1.msra.mxu0 0.0
  %284 = vmatprep.subr.mxu0 0.0
  %285 = vmatpush1.msra.mxu0 0.0
  %286 = vmatprep.subr.mxu0 0.0
  %287 = vmatpush1.msra.mxu0 0.0
  %288 = vmatprep.subr.mxu0 0.0
  %289 = vmatpush1.msra.mxu0 0.0
  %290 = vmatprep.mubr.f32.mxu0 0.0
  %291 = vmatmul.mubr.f32.gmra.mrb[0].mxu0 %v208
  %v292 = vpop.f32.mrb[0].mxu0
  %v293 = vadd.f32 0.0, %v292
  %v294 = vpop.f32.mrb[0].mxu0
  %295 = vdwg.mxu0
  %v296 = vadd.f32 %v209, %v293
  %v297 = vtanh.pop %v296
  %v299 = vlaneseq
  %v300 = vshrl.u32 %v299, 7
  %v301 = vsub.s32 0, %v300
  %v302 = vrot.slane %v204, %v301
  %v304 = vmul.f32 %v297, %v302
  %305 = vadd.xlane.f32.xlu0 %v304
  %v306 = vpop.xlane.xlu0 %305
  %vm307 = vcmp.eq.s32.totalorder %v207, 0
  %v308 = vsel %vm307, %v306, 0.0
  %s309 = scalar_lea.vmem [#allocation3], 8
  %v310 = vld [vmem:[%s309] sm:$0xff]
  %311 = vmatprep.subr.mxu0 0.0
  %312 = vmatpush1.msra.mxu0 %v210
  %313 = vmatprep.subr.mxu0 0.0
  %314 = vmatpush1.msra.mxu0 %v211
  %315 = vmatprep.subr.mxu0 0.0
  %316 = vmatpush1.msra.mxu0 %v212
  %317 = vmatprep.subr.mxu0 0.0
  %318 = vmatpush1.msra.mxu0 %v213
  %319 = vmatprep.subr.mxu0 0.0
  %320 = vmatpush1.msra.mxu0 %v214
  %321 = vmatprep.subr.mxu0 0.0
  %322 = vmatpush1.msra.mxu0 %v215
  %323 = vmatprep.subr.mxu0 0.0
  %324 = vmatpush1.msra.mxu0 %v216
  %325 = vmatprep.subr.mxu0 0.0
  %326 = vmatpush1.msra.mxu0 %v217
  %327 = vmatprep.subr.mxu0 0.0
  %328 = vmatpush1.msra.mxu0 %v218
  %329 = vmatprep.subr.mxu0 0.0
  %330 = vmatpush1.msra.mxu0 %v219
  %331 = vmatprep.subr.mxu0 0.0
  %332 = vmatpush1.msra.mxu0 %v220
  %333 = vmatprep.subr.mxu0 0.0
  %334 = vmatpush1.msra.mxu0 %v221
  %335 = vmatprep.subr.mxu0 0.0
  %336 = vmatpush1.msra.mxu0 %v222
  %337 = vmatprep.subr.mxu0 0.0
  %338 = vmatpush1.msra.mxu0 %v223
  %339 = vmatprep.subr.mxu0 0.0
  %340 = vmatpush1.msra.mxu0 %v224
  %341 = vmatprep.subr.mxu0 0.0
  %342 = vmatpush1.msra.mxu0 %v225
  %343 = vmatprep.subr.mxu0 0.0
  %344 = vmatpush1.msra.mxu0 0.0
  %345 = vmatprep.subr.mxu0 0.0
  %346 = vmatpush1.msra.mxu0 0.0
  %347 = vmatprep.subr.mxu0 0.0
  %348 = vmatpush1.msra.mxu0 0.0
  %349 = vmatprep.subr.mxu0 0.0
  %350 = vmatpush1.msra.mxu0 0.0
  %351 = vmatprep.subr.mxu0 0.0
  %352 = vmatpush1.msra.mxu0 0.0
  %353 = vmatprep.subr.mxu0 0.0
  %354 = vmatpush1.msra.mxu0 0.0
  %355 = vmatprep.subr.mxu0 0.0
  %356 = vmatpush1.msra.mxu0 0.0
  %357 = vmatprep.subr.mxu0 0.0
  %358 = vmatpush1.msra.mxu0 0.0
  %359 = vmatprep.subr.mxu0 0.0
  %360 = vmatpush1.msra.mxu0 0.0
  %361 = vmatprep.subr.mxu0 0.0
  %362 = vmatpush1.msra.mxu0 0.0
  %363 = vmatprep.subr.mxu0 0.0
  %364 = vmatpush1.msra.mxu0 0.0
  %365 = vmatprep.subr.mxu0 0.0
  %366 = vmatpush1.msra.mxu0 0.0
  %367 = vmatprep.subr.mxu0 0.0
  %368 = vmatpush1.msra.mxu0 0.0
  %369 = vmatprep.subr.mxu0 0.0
  %370 = vmatpush1.msra.mxu0 0.0
  %371 = vmatprep.subr.mxu0 0.0
  %372 = vmatpush1.msra.mxu0 0.0
  %373 = vmatprep.subr.mxu0 0.0
  %374 = vmatpush1.msra.mxu0 0.0
  %375 = vmatprep.mubr.f32.mxu0 0.0
  %376 = vmatmul.mubr.f32.gmra.mrb[0].mxu0 %v297
  %v377 = vpop.f32.mrb[0].mxu0
  %v378 = vadd.f32 0.0, %v377
  %v379 = vpop.f32.mrb[0].mxu0
  %380 = vdwg.mxu0
  %v381 = vadd.f32 %v310, %v378
  %v382 = vtanh.pop %v381
  %v383 = vmul.f32 %v382, %v302
  %384 = vadd.xlane.f32.xlu0 %v383
  %v385 = vpop.xlane.xlu0 %384
  %vm386 = vcmp.eq.s32.totalorder %v207, 1
  %v387 = vsel %vm386, %v385, %v308
  %s388 = scalar_lea.vmem [#allocation3], 16
  %v389 = vld [vmem:[%s388] sm:$0xff]
  %390 = vmatprep.subr.mxu0 0.0
  %391 = vmatpush1.msra.mxu0 %v210
  %392 = vmatprep.subr.mxu0 0.0
  %393 = vmatpush1.msra.mxu0 %v211
  %394 = vmatprep.subr.mxu0 0.0
  %395 = vmatpush1.msra.mxu0 %v212
  %396 = vmatprep.subr.mxu0 0.0
  %397 = vmatpush1.msra.mxu0 %v213
  %398 = vmatprep.subr.mxu0 0.0
  %399 = vmatpush1.msra.mxu0 %v214
  %400 = vmatprep.subr.mxu0 0.0
  %401 = vmatpush1.msra.mxu0 %v215
  %402 = vmatprep.subr.mxu0 0.0
  %403 = vmatpush1.msra.mxu0 %v216
  %404 = vmatprep.subr.mxu0 0.0
  %405 = vmatpush1.msra.mxu0 %v217
  %406 = vmatprep.subr.mxu0 0.0
  %407 = vmatpush1.msra.mxu0 %v218
  %408 = vmatprep.subr.mxu0 0.0
  %409 = vmatpush1.msra.mxu0 %v219
  %410 = vmatprep.subr.mxu0 0.0
  %411 = vmatpush1.msra.mxu0 %v220
  %412 = vmatprep.subr.mxu0 0.0
  %413 = vmatpush1.msra.mxu0 %v221
  %414 = vmatprep.subr.mxu0 0.0
  %415 = vmatpush1.msra.mxu0 %v222
  %416 = vmatprep.subr.mxu0 0.0
  %417 = vmatpush1.msra.mxu0 %v223
  %418 = vmatprep.subr.mxu0 0.0
  %419 = vmatpush1.msra.mxu0 %v224
  %420 = vmatprep.subr.mxu0 0.0
  %421 = vmatpush1.msra.mxu0 %v225
  %422 = vmatprep.subr.mxu0 0.0
  %423 = vmatpush1.msra.mxu0 0.0
  %424 = vmatprep.subr.mxu0 0.0
  %425 = vmatpush1.msra.mxu0 0.0
  %426 = vmatprep.subr.mxu0 0.0
  %427 = vmatpush1.msra.mxu0 0.0
  %428 = vmatprep.subr.mxu0 0.0
  %429 = vmatpush1.msra.mxu0 0.0
  %430 = vmatprep.subr.mxu0 0.0
  %431 = vmatpush1.msra.mxu0 0.0
  %432 = vmatprep.subr.mxu0 0.0
  %433 = vmatpush1.msra.mxu0 0.0
  %434 = vmatprep.subr.mxu0 0.0
  %435 = vmatpush1.msra.mxu0 0.0
  %436 = vmatprep.subr.mxu0 0.0
  %437 = vmatpush1.msra.mxu0 0.0
  %438 = vmatprep.subr.mxu0 0.0
  %439 = vmatpush1.msra.mxu0 0.0
  %440 = vmatprep.subr.mxu0 0.0
  %441 = vmatpush1.msra.mxu0 0.0
  %442 = vmatprep.subr.mxu0 0.0
  %443 = vmatpush1.msra.mxu0 0.0
  %444 = vmatprep.subr.mxu0 0.0
  %445 = vmatpush1.msra.mxu0 0.0
  %446 = vmatprep.subr.mxu0 0.0
  %447 = vmatpush1.msra.mxu0 0.0
  %448 = vmatprep.subr.mxu0 0.0
  %449 = vmatpush1.msra.mxu0 0.0
  %450 = vmatprep.subr.mxu0 0.0
  %451 = vmatpush1.msra.mxu0 0.0
  %452 = vmatprep.subr.mxu0 0.0
  %453 = vmatpush1.msra.mxu0 0.0
  %454 = vmatprep.mubr.f32.mxu0 0.0
  %455 = vmatmul.mubr.f32.gmra.mrb[0].mxu0 %v382
  %v456 = vpop.f32.mrb[0].mxu0
  %v457 = vadd.f32 0.0, %v456
  %v458 = vpop.f32.mrb[0].mxu0
  %459 = vdwg.mxu0
  %v460 = vadd.f32 %v389, %v457
  %v461 = vtanh.pop %v460
  %v462 = vmul.f32 %v461, %v302
  %463 = vadd.xlane.f32.xlu0 %v462
  %v464 = vpop.xlane.xlu0 %463
  %vm465 = vcmp.eq.s32.totalorder %v207, 2
  %v466 = vsel %vm465, %v464, %v387
  %s467 = scalar_lea.vmem [#allocation3], 24
  %v468 = vld [vmem:[%s467] sm:$0xff]
  %469 = vmatprep.subr.mxu0 0.0
  %470 = vmatpush1.msra.mxu0 %v210
  %471 = vmatprep.subr.mxu0 0.0
  %472 = vmatpush1.msra.mxu0 %v211
  %473 = vmatprep.subr.mxu0 0.0
  %474 = vmatpush1.msra.mxu0 %v212
  %475 = vmatprep.subr.mxu0 0.0
  %476 = vmatpush1.msra.mxu0 %v213
  %477 = vmatprep.subr.mxu0 0.0
  %478 = vmatpush1.msra.mxu0 %v214
  %479 = vmatprep.subr.mxu0 0.0
  %480 = vmatpush1.msra.mxu0 %v215
  %481 = vmatprep.subr.mxu0 0.0
  %482 = vmatpush1.msra.mxu0 %v216
  %483 = vmatprep.subr.mxu0 0.0
  %484 = vmatpush1.msra.mxu0 %v217
  %485 = vmatprep.subr.mxu0 0.0
  %486 = vmatpush1.msra.mxu0 %v218
  %487 = vmatprep.subr.mxu0 0.0
  %488 = vmatpush1.msra.mxu0 %v219
  %489 = vmatprep.subr.mxu0 0.0
  %490 = vmatpush1.msra.mxu0 %v220
  %491 = vmatprep.subr.mxu0 0.0
  %492 = vmatpush1.msra.mxu0 %v221
  %493 = vmatprep.subr.mxu0 0.0
  %494 = vmatpush1.msra.mxu0 %v222
  %495 = vmatprep.subr.mxu0 0.0
  %496 = vmatpush1.msra.mxu0 %v223
  %497 = vmatprep.subr.mxu0 0.0
  %498 = vmatpush1.msra.mxu0 %v224
  %499 = vmatprep.subr.mxu0 0.0
  %500 = vmatpush1.msra.mxu0 %v225
  %501 = vmatprep.subr.mxu0 0.0
  %502 = vmatpush1.msra.mxu0 0.0
  %503 = vmatprep.subr.mxu0 0.0
  %504 = vmatpush1.msra.mxu0 0.0
  %505 = vmatprep.subr.mxu0 0.0
  %506 = vmatpush1.msra.mxu0 0.0
  %507 = vmatprep.subr.mxu0 0.0
  %508 = vmatpush1.msra.mxu0 0.0
  %509 = vmatprep.subr.mxu0 0.0
  %510 = vmatpush1.msra.mxu0 0.0
  %511 = vmatprep.subr.mxu0 0.0
  %512 = vmatpush1.msra.mxu0 0.0
  %513 = vmatprep.subr.mxu0 0.0
  %514 = vmatpush1.msra.mxu0 0.0
  %515 = vmatprep.subr.mxu0 0.0
  %516 = vmatpush1.msra.mxu0 0.0
  %517 = vmatprep.subr.mxu0 0.0
  %518 = vmatpush1.msra.mxu0 0.0
  %519 = vmatprep.subr.mxu0 0.0
  %520 = vmatpush1.msra.mxu0 0.0
  %521 = vmatprep.subr.mxu0 0.0
  %522 = vmatpush1.msra.mxu0 0.0
  %523 = vmatprep.subr.mxu0 0.0
  %524 = vmatpush1.msra.mxu0 0.0
  %525 = vmatprep.subr.mxu0 0.0
  %526 = vmatpush1.msra.mxu0 0.0
  %527 = vmatprep.subr.mxu0 0.0
  %528 = vmatpush1.msra.mxu0 0.0
  %529 = vmatprep.subr.mxu0 0.0
  %530 = vmatpush1.msra.mxu0 0.0
  %531 = vmatprep.subr.mxu0 0.0
  %532 = vmatpush1.msra.mxu0 0.0
  %533 = vmatprep.mubr.f32.mxu0 0.0
  %534 = vmatmul.mubr.f32.gmra.mrb[0].mxu0 %v461
  %v535 = vpop.f32.mrb[0].mxu0
  %v536 = vadd.f32 0.0, %v535
  %v537 = vpop.f32.mrb[0].mxu0
  %538 = vdwg.mxu0
  %v539 = vadd.f32 %v468, %v536
  %v540 = vtanh.pop %v539
  %v541 = vmul.f32 %v540, %v302
  %542 = vadd.xlane.f32.xlu0 %v541
  %v543 = vpop.xlane.xlu0 %542
  %vm544 = vcmp.eq.s32.totalorder %v207, 3
  %v545 = vsel %vm544, %v543, %v466
  %s546 = scalar_lea.vmem [#allocation3], 32
  %v547 = vld [vmem:[%s546] sm:$0xff]
  %548 = vmatprep.subr.mxu0 0.0
  %549 = vmatpush1.msra.mxu0 %v210
  %550 = vmatprep.subr.mxu0 0.0
  %551 = vmatpush1.msra.mxu0 %v211
  %552 = vmatprep.subr.mxu0 0.0
  %553 = vmatpush1.msra.mxu0 %v212
  %554 = vmatprep.subr.mxu0 0.0
  %555 = vmatpush1.msra.mxu0 %v213
  %556 = vmatprep.subr.mxu0 0.0
  %557 = vmatpush1.msra.mxu0 %v214
  %558 = vmatprep.subr.mxu0 0.0
  %559 = vmatpush1.msra.mxu0 %v215
  %560 = vmatprep.subr.mxu0 0.0
  %561 = vmatpush1.msra.mxu0 %v216
  %562 = vmatprep.subr.mxu0 0.0
  %563 = vmatpush1.msra.mxu0 %v217
  %564 = vmatprep.subr.mxu0 0.0
  %565 = vmatpush1.msra.mxu0 %v218
  %566 = vmatprep.subr.mxu0 0.0
  %567 = vmatpush1.msra.mxu0 %v219
  %568 = vmatprep.subr.mxu0 0.0
  %569 = vmatpush1.msra.mxu0 %v220
  %570 = vmatprep.subr.mxu0 0.0
  %571 = vmatpush1.msra.mxu0 %v221
  %572 = vmatprep.subr.mxu0 0.0
  %573 = vmatpush1.msra.mxu0 %v222
  %574 = vmatprep.subr.mxu0 0.0
  %575 = vmatpush1.msra.mxu0 %v223
  %576 = vmatprep.subr.mxu0 0.0
  %577 = vmatpush1.msra.mxu0 %v224
  %578 = vmatprep.subr.mxu0 0.0
  %579 = vmatpush1.msra.mxu0 %v225
  %580 = vmatprep.subr.mxu0 0.0
  %581 = vmatpush1.msra.mxu0 0.0
  %582 = vmatprep.subr.mxu0 0.0
  %583 = vmatpush1.msra.mxu0 0.0
  %584 = vmatprep.subr.mxu0 0.0
  %585 = vmatpush1.msra.mxu0 0.0
  %586 = vmatprep.subr.mxu0 0.0
  %587 = vmatpush1.msra.mxu0 0.0
  %588 = vmatprep.subr.mxu0 0.0
  %589 = vmatpush1.msra.mxu0 0.0
  %590 = vmatprep.subr.mxu0 0.0
  %591 = vmatpush1.msra.mxu0 0.0
  %592 = vmatprep.subr.mxu0 0.0
  %593 = vmatpush1.msra.mxu0 0.0
  %594 = vmatprep.subr.mxu0 0.0
  %595 = vmatpush1.msra.mxu0 0.0
  %596 = vmatprep.subr.mxu0 0.0
  %597 = vmatpush1.msra.mxu0 0.0
  %598 = vmatprep.subr.mxu0 0.0
  %599 = vmatpush1.msra.mxu0 0.0
  %600 = vmatprep.subr.mxu0 0.0
  %601 = vmatpush1.msra.mxu0 0.0
  %602 = vmatprep.subr.mxu0 0.0
  %603 = vmatpush1.msra.mxu0 0.0
  %604 = vmatprep.subr.mxu0 0.0
  %605 = vmatpush1.msra.mxu0 0.0
  %606 = vmatprep.subr.mxu0 0.0
  %607 = vmatpush1.msra.mxu0 0.0
  %608 = vmatprep.subr.mxu0 0.0
  %609 = vmatpush1.msra.mxu0 0.0
  %610 = vmatprep.subr.mxu0 0.0
  %611 = vmatpush1.msra.mxu0 0.0
  %612 = vmatprep.mubr.f32.mxu0 0.0
  %613 = vmatmul.mubr.f32.gmra.mrb[0].mxu0 %v540
  %v614 = vpop.f32.mrb[0].mxu0
  %v615 = vadd.f32 0.0, %v614
  %v616 = vpop.f32.mrb[0].mxu0
  %617 = vdwg.mxu0
  %v618 = vadd.f32 %v547, %v615
  %v619 = vtanh.pop %v618
  %v620 = vmul.f32 %v619, %v302
  %621 = vadd.xlane.f32.xlu0 %v620
  %v622 = vpop.xlane.xlu0 %621
  %vm623 = vcmp.eq.s32.totalorder %v207, 4
  %v624 = vsel %vm623, %v622, %v545
  %s625 = scalar_lea.vmem [#allocation3], 40
  %v626 = vld [vmem:[%s625] sm:$0xff]
  %627 = vmatprep.subr.mxu0 0.0
  %628 = vmatpush1.msra.mxu0 %v210
  %629 = vmatprep.subr.mxu0 0.0
  %630 = vmatpush1.msra.mxu0 %v211
  %631 = vmatprep.subr.mxu0 0.0
  %632 = vmatpush1.msra.mxu0 %v212
  %633 = vmatprep.subr.mxu0 0.0
  %634 = vmatpush1.msra.mxu0 %v213
  %635 = vmatprep.subr.mxu0 0.0
  %636 = vmatpush1.msra.mxu0 %v214
  %637 = vmatprep.subr.mxu0 0.0
  %638 = vmatpush1.msra.mxu0 %v215
  %639 = vmatprep.subr.mxu0 0.0
  %640 = vmatpush1.msra.mxu0 %v216
  %641 = vmatprep.subr.mxu0 0.0
  %642 = vmatpush1.msra.mxu0 %v217
  %643 = vmatprep.subr.mxu0 0.0
  %644 = vmatpush1.msra.mxu0 %v218
  %645 = vmatprep.subr.mxu0 0.0
  %646 = vmatpush1.msra.mxu0 %v219
  %647 = vmatprep.subr.mxu0 0.0
  %648 = vmatpush1.msra.mxu0 %v220
  %649 = vmatprep.subr.mxu0 0.0
  %650 = vmatpush1.msra.mxu0 %v221
  %651 = vmatprep.subr.mxu0 0.0
  %652 = vmatpush1.msra.mxu0 %v222
  %653 = vmatprep.subr.mxu0 0.0
  %654 = vmatpush1.msra.mxu0 %v223
  %655 = vmatprep.subr.mxu0 0.0
  %656 = vmatpush1.msra.mxu0 %v224
  %657 = vmatprep.subr.mxu0 0.0
  %658 = vmatpush1.msra.mxu0 %v225
  %659 = vmatprep.subr.mxu0 0.0
  %660 = vmatpush1.msra.mxu0 0.0
  %661 = vmatprep.subr.mxu0 0.0
  %662 = vmatpush1.msra.mxu0 0.0
  %663 = vmatprep.subr.mxu0 0.0
  %664 = vmatpush1.msra.mxu0 0.0
  %665 = vmatprep.subr.mxu0 0.0
  %666 = vmatpush1.msra.mxu0 0.0
  %667 = vmatprep.subr.mxu0 0.0
  %668 = vmatpush1.msra.mxu0 0.0
  %669 = vmatprep.subr.mxu0 0.0
  %670 = vmatpush1.msra.mxu0 0.0
  %671 = vmatprep.subr.mxu0 0.0
  %672 = vmatpush1.msra.mxu0 0.0
  %673 = vmatprep.subr.mxu0 0.0
  %674 = vmatpush1.msra.mxu0 0.0
  %675 = vmatprep.subr.mxu0 0.0
  %676 = vmatpush1.msra.mxu0 0.0
  %677 = vmatprep.subr.mxu0 0.0
  %678 = vmatpush1.msra.mxu0 0.0
  %679 = vmatprep.subr.mxu0 0.0
  %680 = vmatpush1.msra.mxu0 0.0
  %681 = vmatprep.subr.mxu0 0.0
  %682 = vmatpush1.msra.mxu0 0.0
  %683 = vmatprep.subr.mxu0 0.0
  %684 = vmatpush1.msra.mxu0 0.0
  %685 = vmatprep.subr.mxu0 0.0
  %686 = vmatpush1.msra.mxu0 0.0
  %687 = vmatprep.subr.mxu0 0.0
  %688 = vmatpush1.msra.mxu0 0.0
  %689 = vmatprep.subr.mxu0 0.0
  %690 = vmatpush1.msra.mxu0 0.0
  %691 = vmatprep.mubr.f32.mxu0 0.0
  %692 = vmatmul.mubr.f32.gmra.mrb[0].mxu0 %v619
  %v693 = vpop.f32.mrb[0].mxu0
  %v694 = vadd.f32 0.0, %v693
  %v695 = vpop.f32.mrb[0].mxu0
  %696 = vdwg.mxu0
  %v697 = vadd.f32 %v626, %v694
  %v698 = vtanh.pop %v697
  %v699 = vmul.f32 %v698, %v302
  %700 = vadd.xlane.f32.xlu0 %v699
  %v701 = vpop.xlane.xlu0 %700
  %vm702 = vcmp.eq.s32.totalorder %v207, 5
  %v703 = vsel %vm702, %v701, %v624
  %s704 = scalar_lea.vmem [#allocation3], 48
  %v705 = vld [vmem:[%s704] sm:$0xff]
  %706 = vmatprep.subr.mxu0 0.0
  %707 = vmatpush1.msra.mxu0 %v210
  %708 = vmatprep.subr.mxu0 0.0
  %709 = vmatpush1.msra.mxu0 %v211
  %710 = vmatprep.subr.mxu0 0.0
  %711 = vmatpush1.msra.mxu0 %v212
  %712 = vmatprep.subr.mxu0 0.0
  %713 = vmatpush1.msra.mxu0 %v213
  %714 = vmatprep.subr.mxu0 0.0
  %715 = vmatpush1.msra.mxu0 %v214
  %716 = vmatprep.subr.mxu0 0.0
  %717 = vmatpush1.msra.mxu0 %v215
  %718 = vmatprep.subr.mxu0 0.0
  %719 = vmatpush1.msra.mxu0 %v216
  %720 = vmatprep.subr.mxu0 0.0
  %721 = vmatpush1.msra.mxu0 %v217
  %722 = vmatprep.subr.mxu0 0.0
  %723 = vmatpush1.msra.mxu0 %v218
  %724 = vmatprep.subr.mxu0 0.0
  %725 = vmatpush1.msra.mxu0 %v219
  %726 = vmatprep.subr.mxu0 0.0
  %727 = vmatpush1.msra.mxu0 %v220
  %728 = vmatprep.subr.mxu0 0.0
  %729 = vmatpush1.msra.mxu0 %v221
  %730 = vmatprep.subr.mxu0 0.0
  %731 = vmatpush1.msra.mxu0 %v222
  %732 = vmatprep.subr.mxu0 0.0
  %733 = vmatpush1.msra.mxu0 %v223
  %734 = vmatprep.subr.mxu0 0.0
  %735 = vmatpush1.msra.mxu0 %v224
  %736 = vmatprep.subr.mxu0 0.0
  %737 = vmatpush1.msra.mxu0 %v225
  %738 = vmatprep.subr.mxu0 0.0
  %739 = vmatpush1.msra.mxu0 0.0
  %740 = vmatprep.subr.mxu0 0.0
  %741 = vmatpush1.msra.mxu0 0.0
  %742 = vmatprep.subr.mxu0 0.0
  %743 = vmatpush1.msra.mxu0 0.0
  %744 = vmatprep.subr.mxu0 0.0
  %745 = vmatpush1.msra.mxu0 0.0
  %746 = vmatprep.subr.mxu0 0.0
  %747 = vmatpush1.msra.mxu0 0.0
  %748 = vmatprep.subr.mxu0 0.0
  %749 = vmatpush1.msra.mxu0 0.0
  %750 = vmatprep.subr.mxu0 0.0
  %751 = vmatpush1.msra.mxu0 0.0
  %752 = vmatprep.subr.mxu0 0.0
  %753 = vmatpush1.msra.mxu0 0.0
  %754 = vmatprep.subr.mxu0 0.0
  %755 = vmatpush1.msra.mxu0 0.0
  %756 = vmatprep.subr.mxu0 0.0
  %757 = vmatpush1.msra.mxu0 0.0
  %758 = vmatprep.subr.mxu0 0.0
  %759 = vmatpush1.msra.mxu0 0.0
  %760 = vmatprep.subr.mxu0 0.0
  %761 = vmatpush1.msra.mxu0 0.0
  %762 = vmatprep.subr.mxu0 0.0
  %763 = vmatpush1.msra.mxu0 0.0
  %764 = vmatprep.subr.mxu0 0.0
  %765 = vmatpush1.msra.mxu0 0.0
  %766 = vmatprep.subr.mxu0 0.0
  %767 = vmatpush1.msra.mxu0 0.0
  %768 = vmatprep.subr.mxu0 0.0
  %769 = vmatpush1.msra.mxu0 0.0
  %770 = vmatprep.mubr.f32.mxu0 0.0
  %771 = vmatmul.mubr.f32.gmra.mrb[0].mxu0 %v698
  %v772 = vpop.f32.mrb[0].mxu0
  %v773 = vadd.f32 0.0, %v772
  %v774 = vpop.f32.mrb[0].mxu0
  %775 = vdwg.mxu0
  %v776 = vadd.f32 %v705, %v773
  %v777 = vtanh.pop %v776
  %v778 = vmul.f32 %v777, %v302
  %779 = vadd.xlane.f32.xlu0 %v778
  %v780 = vpop.xlane.xlu0 %779
  %vm781 = vcmp.eq.s32.totalorder %v207, 6
  %v782 = vsel %vm781, %v780, %v703
  %s783 = scalar_lea.vmem [#allocation3], 56
  %v784 = vld [vmem:[%s783] sm:$0xff]
  %785 = vmatprep.subr.mxu0 0.0
  %786 = vmatpush1.msra.mxu0 %v210
  %787 = vmatprep.subr.mxu0 0.0
  %788 = vmatpush1.msra.mxu0 %v211
  %789 = vmatprep.subr.mxu0 0.0
  %790 = vmatpush1.msra.mxu0 %v212
  %791 = vmatprep.subr.mxu0 0.0
  %792 = vmatpush1.msra.mxu0 %v213
  %793 = vmatprep.subr.mxu0 0.0
  %794 = vmatpush1.msra.mxu0 %v214
  %795 = vmatprep.subr.mxu0 0.0
  %796 = vmatpush1.msra.mxu0 %v215
  %797 = vmatprep.subr.mxu0 0.0
  %798 = vmatpush1.msra.mxu0 %v216
  %799 = vmatprep.subr.mxu0 0.0
  %800 = vmatpush1.msra.mxu0 %v217
  %801 = vmatprep.subr.mxu0 0.0
  %802 = vmatpush1.msra.mxu0 %v218
  %803 = vmatprep.subr.mxu0 0.0
  %804 = vmatpush1.msra.mxu0 %v219
  %805 = vmatprep.subr.mxu0 0.0
  %806 = vmatpush1.msra.mxu0 %v220
  %807 = vmatprep.subr.mxu0 0.0
  %808 = vmatpush1.msra.mxu0 %v221
  %809 = vmatprep.subr.mxu0 0.0
  %810 = vmatpush1.msra.mxu0 %v222
  %811 = vmatprep.subr.mxu0 0.0
  %812 = vmatpush1.msra.mxu0 %v223
  %813 = vmatprep.subr.mxu0 0.0
  %814 = vmatpush1.msra.mxu0 %v224
  %815 = vmatprep.subr.mxu0 0.0
  %816 = vmatpush1.msra.mxu0 %v225
  %817 = vmatprep.subr.mxu0 0.0
  %818 = vmatpush1.msra.mxu0 0.0
  %819 = vmatprep.subr.mxu0 0.0
  %820 = vmatpush1.msra.mxu0 0.0
  %821 = vmatprep.subr.mxu0 0.0
  %822 = vmatpush1.msra.mxu0 0.0
  %823 = vmatprep.subr.mxu0 0.0
  %824 = vmatpush1.msra.mxu0 0.0
  %825 = vmatprep.subr.mxu0 0.0
  %826 = vmatpush1.msra.mxu0 0.0
  %827 = vmatprep.subr.mxu0 0.0
  %828 = vmatpush1.msra.mxu0 0.0
  %829 = vmatprep.subr.mxu0 0.0
  %830 = vmatpush1.msra.mxu0 0.0
  %831 = vmatprep.subr.mxu0 0.0
  %832 = vmatpush1.msra.mxu0 0.0
  %833 = vmatprep.subr.mxu0 0.0
  %834 = vmatpush1.msra.mxu0 0.0
  %835 = vmatprep.subr.mxu0 0.0
  %836 = vmatpush1.msra.mxu0 0.0
  %837 = vmatprep.subr.mxu0 0.0
  %838 = vmatpush1.msra.mxu0 0.0
  %839 = vmatprep.subr.mxu0 0.0
  %840 = vmatpush1.msra.mxu0 0.0
  %841 = vmatprep.subr.mxu0 0.0
  %842 = vmatpush1.msra.mxu0 0.0
  %843 = vmatprep.subr.mxu0 0.0
  %844 = vmatpush1.msra.mxu0 0.0
  %845 = vmatprep.subr.mxu0 0.0
  %846 = vmatpush1.msra.mxu0 0.0
  %847 = vmatprep.subr.mxu0 0.0
  %848 = vmatpush1.msra.mxu0 0.0
  %849 = vmatprep.mubr.f32.mxu0 0.0
  %850 = vmatmul.mubr.f32.gmra.mrb[0].mxu0 %v777
  %v851 = vpop.f32.mrb[0].mxu0
  %v852 = vadd.f32 0.0, %v851
  %v853 = vpop.f32.mrb[0].mxu0
  %854 = vdwg.mxu0
  %v855 = vadd.f32 %v784, %v852
  %v856 = vtanh.pop %v855
  %v857 = vmul.f32 %v856, %v302
  %858 = vadd.xlane.f32.xlu0 %v857
  %v859 = vpop.xlane.xlu0 %858
  %vm860 = vcmp.eq.s32.totalorder %v207, 7
  %v861 = vsel %vm860, %v859, %v782
  %862 = vst [vmem:[#allocation2] sm:$0xff] %v856
  %v863 = vstv %s205
  %v864 = vadd.f32 %v861, %v863
  %vm865 = vcmask 64512
  %866 = vst.msk [vmem:[%s38] sm:$0xff] %vm865, %v864
  // Predicated region
  $region34: #{rnn_forward.1} parent=0 // pred_check
    %p867 = pneg %p40
  $region35: #{rnn_forward.1} parent=0 // pred_check_branch
    %869 = sbr.rel (%p867) target = $region37
  $region36: #{rnn_forward.1} parent=0 // pred_region
    %870 = vst [vmem:[%s8] sm:$0xff] %v856
  $region37: #{rnn_forward.1} parent=0 // pred_fallthru
    _
  %s871 = sadd.s32 0, 0
  %p872 = scmp.lt.s32.totalorder %s871, 0
  %s873 = scalar_select %p872, %s871, 0
  %s874 = smul.addr %s873, 8
  %s875 = scalar_lea.vmem %s7, %s874
  // Predicated region
  $region38: #{rnn_forward.1} parent=0 // pred_check
    _
  $region39: #{rnn_forward.1} parent=0 // pred_check_branch
    %877 = sbr.rel (0) target = $region41
  $region40: #{rnn_forward.1} parent=0 // pred_region
    %s878 = sadd.s32 0, 0
  $region41: #{rnn_forward.1} parent=0 // pred_fallthru
    _
  // Predicated region
  $region42: #{rnn_forward.1} parent=0 // pred_check
    _
  $region43: #{rnn_forward.1} parent=0 // pred_check_branch
    %880 = sbr.rel (0) target = $region45
  $region44: #{rnn_forward.1} parent=0 // pred_region
    _
  $region45: #{rnn_forward.1} parent=0 // pred_fallthru
    _
  // Predicated region
  $region46: #{rnn_forward.1} parent=0 // pred_check
    _
  $region47: #{rnn_forward.1} parent=0 // pred_check_branch
    %882 = sbr.rel (0) target = $region49
  $region48: #{rnn_forward.1} parent=0 // pred_region
    %s883 = sadd.s32 0, 0
    %p884 = scmp.lt.s32.totalorder %s883, 0
    %s885 = scalar_select %p884, %s883, 0
    %s886 = smul.addr %s885, 8
    %s887 = scalar_lea.vmem %s7, %s886
  $region49: #{rnn_forward.1} parent=0 // pred_fallthru
    _
  // Predicated region
  $region50: #{rnn_forward.1} parent=0 // pred_check
    _
  $region51: #{rnn_forward.1} parent=0 // pred_check_branch
    %889 = sbr.rel (0) target = $region53
  $region52: #{rnn_forward.1} parent=0 // pred_region
    _
  $region53: #{rnn_forward.1} parent=0 // pred_fallthru
    _

</llo_original>
